<compile_context>
chip_gen: v5e
topology: v5e:2x2
jax: 0.10.0
libtpu: 0.0.40
codegen_flags: <defaults>
</compile_context>

<pallas_src>
import math

import jax
import jax.numpy as jnp
from jax.experimental import pallas as pl
from jax.experimental.pallas import tpu as pltpu


def _sinusoidal_kernel(x_ref, freqs_ref, o_ref):
    # x_ref:     (TILE_B, 1)   f32 in VMEM
    # freqs_ref: (1, dim)      f32 in VMEM (same block every grid step)
    # o_ref:     (TILE_B, dim) out dtype in VMEM
    dim = freqs_ref.shape[-1]
    half_dim = dim // 2

    emb = x_ref[...] * freqs_ref[...]                      # (TILE_B, dim) on VPU
    lane = jax.lax.broadcasted_iota(jnp.int32, emb.shape, dimension=1)
    # First half lanes -> sin, second half lanes -> cos.  Both halves use the
    # same frequency (freqs is duplicated), so this matches
    # cat([sin(x*f), cos(x*f)], -1) exactly, with one full-width store.
    row = jnp.where(lane < half_dim, jnp.sin(emb), jnp.cos(emb))
    o_ref[...] = row.astype(o_ref.dtype)


def _round_up(n: int, m: int) -> int:
    return ((n + m - 1) // m) * m


def sinusoidal_pos_emb(
    x: jax.Array,
    dim: int,
    *,
    tile_b: int = 1024,
    out_dtype=jnp.float32,
) -> jax.Array:
    """Pallas equivalent of SinusoidalPosEmb(dim)(x) for 1-D x of shape (B,)."""
    assert x.ndim == 1, "expected a 1-D batch of scalar positions/timesteps"
    assert dim % 2 == 0, "SinusoidalPosEmb requires an even dim"
    assert dim >= 4, "dim must be >= 4 (half_dim - 1 would be zero otherwise)"

    B = x.shape[0]
    half_dim = dim // 2

    # Trace-time frequency table: freqs[j] = exp(-scale * j), duplicated so it
    # covers the full output width (sin half and cos half share frequencies).
    scale = math.log(10000.0) / (half_dim - 1)
    freqs = jnp.exp(-scale * jnp.arange(half_dim, dtype=jnp.float32))
    freqs_full = jnp.concatenate([freqs, freqs]).reshape(1, dim)

    # Batch tiling: TILE_B rows per grid step, multiple of 8 sublanes.
    tile_b = max(8, min(tile_b, _round_up(B, 8)))
    tile_b = _round_up(tile_b, 8)
    b_padded = _round_up(B, tile_b)

    x2d = x.astype(jnp.float32).reshape(B, 1)
    if b_padded != B:
        x2d = jnp.pad(x2d, ((0, b_padded - B), (0, 0)))

    grid = (b_padded // tile_b,)
    out_bytes = b_padded * dim * jnp.dtype(out_dtype).itemsize

    out = pl.pallas_call(
        _sinusoidal_kernel,
        out_shape=jax.ShapeDtypeStruct((b_padded, dim), out_dtype),
        grid=grid,
        in_specs=[
            pl.BlockSpec((tile_b, 1), lambda i: (i, 0)),
            pl.BlockSpec((1, dim), lambda i: (0, 0)),
        ],
        out_specs=pl.BlockSpec((tile_b, dim), lambda i: (i, 0)),
        compiler_params=pltpu.CompilerParams(
            dimension_semantics=("parallel",),
        ),
        cost_estimate=pl.CostEstimate(
            flops=2 * b_padded * dim,             # mul + select
            transcendentals=2 * b_padded * dim,   # sin + cos on full width
            bytes_accessed=b_padded * 4 + dim * 4 + out_bytes,
        ),
    )(x2d, freqs_full)

    return out[:B] if b_padded != B else out


def _reference(x: jax.Array, dim: int) -> jax.Array:
    # Pure-JAX reference mirroring the PyTorch forward.
    half_dim = dim // 2
    emb = math.log(10000.0) / (half_dim - 1)
    emb = jnp.exp(jnp.arange(half_dim, dtype=jnp.float32) * -emb)
    emb = x.astype(jnp.float32)[:, None] * emb[None, :]
    return jnp.concatenate([jnp.sin(emb), jnp.cos(emb)], axis=-1)


if __name__ == "__main__":
    key = jax.random.PRNGKey(0)
    B = 8
    dim = 32  # SinusoidalPosEmb(dim=32)

    # Deterministic "timesteps" input of shape (B,)
    x = jax.random.uniform(key, (B,), dtype=jnp.float32) * 1000.0

    out = sinusoidal_pos_emb(x, dim)
    out = jax.block_until_ready(out)

    ref = _reference(x, dim)
    assert out.shape == (B, dim)
    assert jnp.allclose(out, ref, atol=1e-5, rtol=1e-5)

    print("KERNEL_OK")
</pallas_src>

<mosaic_0001>
module attributes {stable_mosaic.version = 11 : i64} {
  func.func @_sinusoidal_kernel(%arg0: i32, %arg1: memref<8x1xf32, #tpu.memory_space<vmem>>, %arg2: memref<1x32xf32, #tpu.memory_space<vmem>>, %arg3: memref<8x32xf32, #tpu.memory_space<vmem>>) attributes {dimension_semantics = [#tpu.dimension_semantics<parallel>], iteration_bounds = array<i64: 1>, scalar_prefetch = 0 : i64, scratch_operands = 0 : i64, tpu.core_type = #tpu.core_type<tc>, window_params = [{transform_indices = @transform_0, window_bounds = array<i64: 8, 1>}, {pipeline_mode = #tpu.pipeline_mode<synchronous>, transform_indices = @transform_1, window_bounds = array<i64: 1, 32>}, {transform_indices = @transform_2, window_bounds = array<i64: 8, 32>}]} {
    %c0 = arith.constant 0 : index
    %c0_0 = arith.constant 0 : index
    %0 = vector.load %arg1[%c0, %c0_0] : memref<8x1xf32, #tpu.memory_space<vmem>>, vector<8x1xf32>
    %c0_1 = arith.constant 0 : index
    %c0_2 = arith.constant 0 : index
    %1 = vector.load %arg2[%c0_1, %c0_2] : memref<1x32xf32, #tpu.memory_space<vmem>>, vector<1x32xf32>
    %2 = vector.broadcast %0 : vector<8x1xf32> to vector<8x32xf32>
    %3 = vector.broadcast %1 : vector<1x32xf32> to vector<8x32xf32>
    %4 = arith.mulf %2, %3 : vector<8x32xf32>
    %5 = tpu.iota {dimensions = array<i32: 1>} : vector<8x32xi32>
    %c16_i32 = arith.constant 16 : i32
    %6 = vector.broadcast %c16_i32 : i32 to vector<8x32xi32>
    %7 = arith.cmpi slt, %5, %6 : vector<8x32xi32>
    %8 = math.sin %4 : vector<8x32xf32>
    %9 = math.cos %4 : vector<8x32xf32>
    %10 = arith.select %7, %8, %9 : vector<8x32xi1>, vector<8x32xf32>
    %c0_3 = arith.constant 0 : index
    %c0_4 = arith.constant 0 : index
    %11 = vector.load %arg3[%c0_3, %c0_4] : memref<8x32xf32, #tpu.memory_space<vmem>>, vector<8x32xf32>
    tpu.vector_store %arg3[%c0_3, %c0_4], %10 {strides = array<i32>} : memref<8x32xf32, #tpu.memory_space<vmem>>, vector<8x32xf32>,
    return
  }
  func.func @transform_0(%arg0: i32) -> (i32, i32) {
    %c0_i32 = arith.constant 0 : i32
    %c0_i32_0 = arith.constant 0 : i32
    return %arg0, %c0_i32 : i32, i32
  }
  func.func @transform_1(%arg0: i32) -> (i32, i32) {
    %c0_i32 = arith.constant 0 : i32
    %c0_i32_0 = arith.constant 0 : i32
    %c0_i32_1 = arith.constant 0 : i32
    return %c0_i32, %c0_i32_0 : i32, i32
  }
  func.func @transform_2(%arg0: i32) -> (i32, i32) {
    %c0_i32 = arith.constant 0 : i32
    %c0_i32_0 = arith.constant 0 : i32
    return %arg0, %c0_i32 : i32, i32
  }
}

</mosaic_0001>

<llo_original>
// kernel: tpu_custom_call.1
$region0: #{tpu_custom_call.1}
  #allocation0 [shape = 'u32[]', space=smem, size = 0x4, offset = 0x4, fixed_abs, tag = 'smem constant byte address 0x4 - core index']
  #allocation1 [shape = 'u32[72,128]{1,0:T(1,128)}', space=vmem, size = 0x9000, scoped, tag = 'internal scratch']
  %s0 = inlined_call_operand.vmem [shape: f32[8,1], index: 0, kind: input, shape index: {}]
  %s1 = inlined_call_operand.vmem [shape: f32[1,32], index: 1, kind: input, shape index: {}]
  %s2 = inlined_call_operand.hbm [shape: f32[8,32], index: 2, kind: output, shape index: {}]
  %s3 = sld [smem:[#allocation0]]
  $region18: #{tpu_custom_call.1} parent=0
    _
  %s5 = ssub.s32 1, %s3
  %s6 = scalar_select 0, %s5, %s3
  $region1: #{tpu_custom_call.1} parent=0
    #allocation2 [shape = 'u8[4096]{0}', space=vmem, size = 0x1000, scoped, tag = 'output window, operand 0, single buffered']
    #allocation3 [shape = 's32[1]{0}', space=sflag, size = 0x4, scoped, tag = 'scoped memory for tpu_custom_call.1']
    %7 = vsyncpa [#allocation3], 0
    // Predicated region
    $region2: #{tpu_custom_call.1} parent=1 // pred_check
      _
    $region3: #{tpu_custom_call.1} parent=1 // pred_check_branch
      %9 = sbr.rel (0) target = $region5
    $region4: #{tpu_custom_call.1} parent=1 // pred_region
      _
    $region5: #{tpu_custom_call.1} parent=1 // pred_fallthru
      _
    // Predicated region
    $region6: #{tpu_custom_call.1} parent=1 // pred_check
      _
    $region7: #{tpu_custom_call.1} parent=1 // pred_check_branch
      %11 = sbr.rel (0) target = $region9
    $region8: #{tpu_custom_call.1} parent=1 // pred_region
      _
    $region9: #{tpu_custom_call.1} parent=1 // pred_fallthru
      _
    %v12 = vld [vmem:[%s0] sm:$0xff]
    %v13 = vld [vmem:[%s1] sm:$0x1]
    %15 = vset.pattern.permute.xlu0 0
    %16 = vperm.xlu0 %15, %v12
    %v17 = vpop.permute.xlu0 %16
    %v20 = vperm.slane %v13, 0
    %v22 = vmul.f32 %v17, %v20
    %v23 = vlaneseq
    %v24 = vand.u32 %v23, 127
    %vm25 = vcmp.lt.s32.totalorder %v24, 16
    %v26 = vand.u32 2147483647, %v22
    %vm27 = vcmp.le.f32.partialorder %v26, 0.7853982
    %vm28 = vcmp.lt.s32.totalorder %v22, 0
    %v29 = vand.u32 %v22, 2139095040
    %v30 = vshrl.u32 %v29, 23
    %v31 = vsub.s32 %v30, 127
    %v32 = vand.u32 2147483647, %v22
    %v33 = vand.u32 %v32, 8388607
    %v34 = vor.u32 %v33, 8388608
    %v35 = vsub.s32 0, %v34
    %v36 = vadd.s32 %v31, 1
    %vm37 = vcmp.gt.s32.totalorder %v36, 0
    %v38 = vsel %vm37, %v36, 0
    %v39 = vshrl.u32 %v38, 5
    %v40 = vand.u32 %v38, 31
    %v41 = vsub.s32 32, %v40
    %v42 = vshrl.u32 683565275, %v41
    %v43 = vshll.u32 683565275, %v40
    %v44 = vshrl.u32 2475754826, %v41
    %v45 = vor.u32 %v43, %v44
    %v46 = vshll.u32 2475754826, %v40
    %v47 = vshrl.u32 2131351028, %v41
    %v48 = vor.u32 %v46, %v47
    %v49 = vshll.u32 2131351028, %v40
    %v50 = vshrl.u32 2102212464, %v41
    %v51 = vor.u32 %v49, %v50
    %v52 = vshll.u32 2102212464, %v40
    %v53 = vshrl.u32 920167782, %v41
    %v54 = vor.u32 %v52, %v53
    %v55 = vshll.u32 920167782, %v40
    %v56 = vshrl.u32 1326507024, %v41
    %v57 = vor.u32 %v55, %v56
    %vm58 = vcmp.lt.s32.totalorder %v39, 1
    %vm59 = vcmp.lt.s32.totalorder %v39, 2
    %vm60 = vcmp.lt.s32.totalorder %v39, 3
    %vm61 = vcmp.lt.s32.totalorder %v39, 4
    %v62 = vsel %vm58, %v42, %v45
    %v63 = vsel %vm61, %v51, 2102212464
    %v64 = vsel %vm60, %v48, %v63
    %v65 = vsel %vm59, %v62, %v64
    %v66 = vsel %vm58, %v45, %v48
    %v67 = vsel %vm61, %v54, 920167782
    %v68 = vsel %vm60, %v51, %v67
    %v69 = vsel %vm59, %v66, %v68
    %v70 = vsel %vm58, %v48, %v51
    %v71 = vsel %vm61, %v57, 1326507024
    %v72 = vsel %vm60, %v54, %v71
    %v73 = vsel %vm59, %v70, %v72
    %v74 = vshll.u32 %v34, 8
    %v75 = vand.u32 %v74, 65535
    %v76 = vshrl.u32 %v74, 16
    %v77 = vand.u32 %v73, 65535
    %v78 = vshrl.u32 %v73, 16
    %v79 = vmul.u32 %v75, %v77
    %v80 = vmul.u32 %v75, %v78
    %v81 = vmul.u32 %v76, %v77
    %v82 = vmul.u32 %v76, %v78
    %v83 = vshll.u32 %v80, 16
    %v84 = vshrl.u32 %v80, 16
    %v85 = vshll.u32 %v81, 16
    %v86 = vshrl.u32 %v81, 16
    %vm87 = vc.u32 %v79, %v83
    %v88 = vsel %vm87, 1, 0
    %v89 = vadd.s32 %v79, %v83
    %v90 = vadd.s32 %v82, %v88
    %vm91 = vc.u32 %v89, %v85
    %v92 = vsel %vm91, 1, 0
    %v93 = vadd.s32 %v89, %v85
    %v94 = vadd.s32 %v90, %v92
    %v95 = vadd.s32 %v94, %v84
    %v96 = vadd.s32 %v95, %v86
    %v97 = vand.u32 %v74, 65535
    %v98 = vshrl.u32 %v74, 16
    %v99 = vand.u32 %v69, 65535
    %v100 = vshrl.u32 %v69, 16
    %v101 = vmul.u32 %v97, %v99
    %v102 = vmul.u32 %v97, %v100
    %v103 = vmul.u32 %v98, %v99
    %v104 = vmul.u32 %v98, %v100
    %v105 = vshll.u32 %v102, 16
    %v106 = vshrl.u32 %v102, 16
    %v107 = vshll.u32 %v103, 16
    %v108 = vshrl.u32 %v103, 16
    %vm109 = vc.u32 %v101, %v105
    %v110 = vsel %vm109, 1, 0
    %v111 = vadd.s32 %v101, %v105
    %v112 = vadd.s32 %v104, %v110
    %vm113 = vc.u32 %v111, %v107
    %v114 = vsel %vm113, 1, 0
    %v115 = vadd.s32 %v111, %v107
    %v116 = vadd.s32 %v112, %v114
    %v117 = vadd.s32 %v116, %v106
    %v118 = vadd.s32 %v117, %v108
    %v119 = vmul.u32 %v74, %v65
    %v120 = vadd.s32 %v96, %v115
    %vm121 = vc.u32 %v96, %v115
    %v122 = vadd.s32 %v118, 1
    %v123 = vsel %vm121, %v122, %v118
    %v124 = vadd.s32 %v119, %v123
    %v125 = vadd.s32 %v124, 536870912
    %v126 = vshrl.u32 %v125, 30
    %v127 = vshll.u32 %v126, 30
    %v128 = vsub.s32 %v124, %v127
    %vm129 = vcmp.lt.s32.totalorder %v128, 0
    %v130 = vsub.s32 0, %v128
    %v131 = vsel %vm129, %v130, %v128
    %v132 = vclz %v131
    %v133 = vsub.s32 %v132, 2
    %vm134 = vcmp.gt.s32.totalorder 0, %v133
    %v135 = vsel %vm134, 0, %v133
    %v136 = vsub.s32 32, %v135
    %v137 = vshll.u32 %v128, %v135
    %v138 = vshrl.u32 %v120, %v136
    %v139 = vor.u32 %v137, %v138
    %v140 = vsub.s32 4294967266, %v135
    %v141 = vadd.s32 %v140, 127
    %v142 = vshll.u32 %v141, 23
    %v143 = vor.u32 4788187, %v142
    %v144 = vand.u32 2147483647, %v143
    %v146 = vcvt.s32.f32 %v139
    %v147 = vmul.f32 %v146, %v144
    %v148 = vxor.u32 %v147, 2147483648
    %v149 = vsel %vm28, %v148, %v147
    %v150 = vsub.s32 4, %v126
    %v151 = vsel %vm28, %v150, %v126
    %v152 = vsel %vm27, %v22, %v149
    %v153 = vsel %vm27, 0, %v151
    %v154 = vmul.f32 %v152, %v152
    %v155 = vmul.f32 %v154, -0.001358992
    %v156 = vadd.f32 %v155, 0.041655596
    %v157 = vmul.f32 %v154, %v156
    %v158 = vadd.f32 %v157, -0.4999988
    %v159 = vmul.f32 %v154, %v158
    %v160 = vadd.f32 1.0, %v159
    %v161 = vmul.f32 %v152, %v152
    %v162 = vmul.f32 %v161, -0.00019511016
    %v163 = vadd.f32 %v162, 0.008332121
    %v164 = vmul.f32 %v161, %v163
    %v165 = vadd.f32 %v164, -0.16666654
    %v166 = vmul.f32 %v161, %v165
    %v167 = vadd.f32 %v166, 1.0
    %v168 = vmul.f32 %v167, %v152
    %vm169 = vweird.f32 %v22
    %v170 = vadd.s32 %v153, 3
    %v171 = vand.u32 %v170, 3
    %vm172 = vcmp.lt.s32.totalorder %v171, 2
    %vm173 = vcmp.eq.s32.totalorder %v171, 0
    %v174 = vxor.u32 %v168, 2147483648
    %v175 = vsel %vm173, %v160, %v174
    %vm176 = vcmp.eq.s32.totalorder %v171, 2
    %v177 = vxor.u32 %v160, 2147483648
    %v178 = vsel %vm176, %v177, %v168
    %v179 = vsel %vm172, %v175, %v178
    %v180 = vsel %vm169, nan, %v179
    %v181 = vand.u32 2147483647, %v22
    %vm182 = vcmp.le.f32.partialorder %v181, 0.7853982
    %vm183 = vcmp.lt.s32.totalorder %v22, 0
    %v184 = vand.u32 %v22, 2139095040
    %v185 = vshrl.u32 %v184, 23
    %v186 = vsub.s32 %v185, 127
    %v187 = vand.u32 2147483647, %v22
    %v188 = vand.u32 %v187, 8388607
    %v189 = vor.u32 %v188, 8388608
    %v190 = vsub.s32 0, %v189
    %v191 = vadd.s32 %v186, 1
    %vm192 = vcmp.gt.s32.totalorder %v191, 0
    %v193 = vsel %vm192, %v191, 0
    %v194 = vshrl.u32 %v193, 5
    %v195 = vand.u32 %v193, 31
    %v196 = vsub.s32 32, %v195
    %v197 = vshrl.u32 683565275, %v196
    %v198 = vshll.u32 683565275, %v195
    %v199 = vshrl.u32 2475754826, %v196
    %v200 = vor.u32 %v198, %v199
    %v201 = vshll.u32 2475754826, %v195
    %v202 = vshrl.u32 2131351028, %v196
    %v203 = vor.u32 %v201, %v202
    %v204 = vshll.u32 2131351028, %v195
    %v205 = vshrl.u32 2102212464, %v196
    %v206 = vor.u32 %v204, %v205
    %v207 = vshll.u32 2102212464, %v195
    %v208 = vshrl.u32 920167782, %v196
    %v209 = vor.u32 %v207, %v208
    %v210 = vshll.u32 920167782, %v195
    %v211 = vshrl.u32 1326507024, %v196
    %v212 = vor.u32 %v210, %v211
    %vm213 = vcmp.lt.s32.totalorder %v194, 1
    %vm214 = vcmp.lt.s32.totalorder %v194, 2
    %vm215 = vcmp.lt.s32.totalorder %v194, 3
    %vm216 = vcmp.lt.s32.totalorder %v194, 4
    %v217 = vsel %vm213, %v197, %v200
    %v218 = vsel %vm216, %v206, 2102212464
    %v219 = vsel %vm215, %v203, %v218
    %v220 = vsel %vm214, %v217, %v219
    %v221 = vsel %vm213, %v200, %v203
    %v222 = vsel %vm216, %v209, 920167782
    %v223 = vsel %vm215, %v206, %v222
    %v224 = vsel %vm214, %v221, %v223
    %v225 = vsel %vm213, %v203, %v206
    %v226 = vsel %vm216, %v212, 1326507024
    %v227 = vsel %vm215, %v209, %v226
    %v228 = vsel %vm214, %v225, %v227
    %v229 = vshll.u32 %v189, 8
    %v230 = vand.u32 %v229, 65535
    %v231 = vshrl.u32 %v229, 16
    %v232 = vand.u32 %v228, 65535
    %v233 = vshrl.u32 %v228, 16
    %v234 = vmul.u32 %v230, %v232
    %v235 = vmul.u32 %v230, %v233
    %v236 = vmul.u32 %v231, %v232
    %v237 = vmul.u32 %v231, %v233
    %v238 = vshll.u32 %v235, 16
    %v239 = vshrl.u32 %v235, 16
    %v240 = vshll.u32 %v236, 16
    %v241 = vshrl.u32 %v236, 16
    %vm242 = vc.u32 %v234, %v238
    %v243 = vsel %vm242, 1, 0
    %v244 = vadd.s32 %v234, %v238
    %v245 = vadd.s32 %v237, %v243
    %vm246 = vc.u32 %v244, %v240
    %v247 = vsel %vm246, 1, 0
    %v248 = vadd.s32 %v244, %v240
    %v249 = vadd.s32 %v245, %v247
    %v250 = vadd.s32 %v249, %v239
    %v251 = vadd.s32 %v250, %v241
    %v252 = vand.u32 %v229, 65535
    %v253 = vshrl.u32 %v229, 16
    %v254 = vand.u32 %v224, 65535
    %v255 = vshrl.u32 %v224, 16
    %v256 = vmul.u32 %v252, %v254
    %v257 = vmul.u32 %v252, %v255
    %v258 = vmul.u32 %v253, %v254
    %v259 = vmul.u32 %v253, %v255
    %v260 = vshll.u32 %v257, 16
    %v261 = vshrl.u32 %v257, 16
    %v262 = vshll.u32 %v258, 16
    %v263 = vshrl.u32 %v258, 16
    %vm264 = vc.u32 %v256, %v260
    %v265 = vsel %vm264, 1, 0
    %v266 = vadd.s32 %v256, %v260
    %v267 = vadd.s32 %v259, %v265
    %vm268 = vc.u32 %v266, %v262
    %v269 = vsel %vm268, 1, 0
    %v270 = vadd.s32 %v266, %v262
    %v271 = vadd.s32 %v267, %v269
    %v272 = vadd.s32 %v271, %v261
    %v273 = vadd.s32 %v272, %v263
    %v274 = vmul.u32 %v229, %v220
    %v275 = vadd.s32 %v251, %v270
    %vm276 = vc.u32 %v251, %v270
    %v277 = vadd.s32 %v273, 1
    %v278 = vsel %vm276, %v277, %v273
    %v279 = vadd.s32 %v274, %v278
    %v280 = vadd.s32 %v279, 536870912
    %v281 = vshrl.u32 %v280, 30
    %v282 = vshll.u32 %v281, 30
    %v283 = vsub.s32 %v279, %v282
    %vm284 = vcmp.lt.s32.totalorder %v283, 0
    %v285 = vsub.s32 0, %v283
    %v286 = vsel %vm284, %v285, %v283
    %v287 = vclz %v286
    %v288 = vsub.s32 %v287, 2
    %vm289 = vcmp.gt.s32.totalorder 0, %v288
    %v290 = vsel %vm289, 0, %v288
    %v291 = vsub.s32 32, %v290
    %v292 = vshll.u32 %v283, %v290
    %v293 = vshrl.u32 %v275, %v291
    %v294 = vor.u32 %v292, %v293
    %v295 = vsub.s32 4294967266, %v290
    %v296 = vadd.s32 %v295, 127
    %v297 = vshll.u32 %v296, 23
    %v298 = vor.u32 4788187, %v297
    %v299 = vand.u32 2147483647, %v298
    %v301 = vcvt.s32.f32 %v294
    %v302 = vmul.f32 %v301, %v299
    %v303 = vxor.u32 %v302, 2147483648
    %v304 = vsel %vm183, %v303, %v302
    %v305 = vsub.s32 4, %v281
    %v306 = vsel %vm183, %v305, %v281
    %v307 = vsel %vm182, %v22, %v304
    %v308 = vsel %vm182, 0, %v306
    %v309 = vmul.f32 %v307, %v307
    %v310 = vmul.f32 %v309, -0.001358992
    %v311 = vadd.f32 %v310, 0.041655596
    %v312 = vmul.f32 %v309, %v311
    %v313 = vadd.f32 %v312, -0.4999988
    %v314 = vmul.f32 %v309, %v313
    %v315 = vadd.f32 1.0, %v314
    %v316 = vmul.f32 %v307, %v307
    %v317 = vmul.f32 %v316, -0.00019511016
    %v318 = vadd.f32 %v317, 0.008332121
    %v319 = vmul.f32 %v316, %v318
    %v320 = vadd.f32 %v319, -0.16666654
    %v321 = vmul.f32 %v316, %v320
    %v322 = vadd.f32 %v321, 1.0
    %v323 = vmul.f32 %v322, %v307
    %vm324 = vweird.f32 %v22
    %v325 = vand.u32 %v308, 3
    %vm326 = vcmp.lt.s32.totalorder %v325, 2
    %vm327 = vcmp.eq.s32.totalorder %v325, 0
    %v328 = vxor.u32 %v323, 2147483648
    %v329 = vsel %vm327, %v315, %v328
    %vm330 = vcmp.eq.s32.totalorder %v325, 2
    %v331 = vxor.u32 %v315, 2147483648
    %v332 = vsel %vm330, %v331, %v323
    %v333 = vsel %vm326, %v329, %v332
    %v334 = vsel %vm324, nan, %v333
    %v335 = vsel %vm25, %v180, %v334
    %vm336 = vcmask 261120
    %337 = vst.msk [vmem:[#allocation2] sm:$0xff] %vm336, %v335
    // Predicated region
    $region10: #{tpu_custom_call.1} parent=1 // pred_check
      _
    $region11: #{tpu_custom_call.1} parent=1 // pred_check_branch
      %339 = sbr.rel (0) target = $region13
    $region12: #{tpu_custom_call.1} parent=1 // pred_region
      %341 = vsyncadd [#allocation3], 0
      %s343 = sshll.u32 [#allocation2], 4
      %s344 = int_to_ptr.vmem [resolvable:$true] %s343
      %s345 = sshll.u32 %s2, 4
      %s346 = int_to_ptr.hbm [resolvable:$true] %s345
      %348 = dma.vmem_to_hbm [thread:$0]  %s344, 128, %s346, [#allocation3]
    $region13: #{tpu_custom_call.1} parent=1 // pred_fallthru
      _
    // Predicated region
    $region14: #{tpu_custom_call.1} parent=1 // pred_check
      _
    $region15: #{tpu_custom_call.1} parent=1 // pred_check_branch
      %350 = sbr.rel (0) target = $region17
    $region16: #{tpu_custom_call.1} parent=1 // pred_region
      %352 = dma.done [#allocation3], 128
    $region17: #{tpu_custom_call.1} parent=1 // pred_fallthru
      _
    %353 = vsyncpa [#allocation3], 1

</llo_original>
